<compile_context>
chip_gen: v5e
topology: v5e:2x2
jax: 0.10.0
libtpu: 0.0.40
codegen_flags: <defaults>
</compile_context>

<pallas_src>
import math

import jax
import jax.numpy as jnp
from jax.experimental import pallas as pl
from jax.experimental.pallas import tpu as pltpu


# --- packed parameter layout (all row offsets are multiples of 8) -----------
_R_W1, _R_B1 = 0, 8          # W1^T in rows 0..2, b1 in row 8
_R_W2, _R_B2 = 16, 56        # W2^T in rows 16..55, b2 in row 56
_R_W3, _R_B3 = 64, 104       # W3^T in rows 64..103, b3 in row 104
_R_W4, _R_B4 = 112, 152      # W4^T (padded to 40 cols) rows 112..151, b4 row 152
_P_ROWS, _P_COLS = 160, 40


def _split_bf16(a):
    hi = a.astype(jnp.bfloat16)
    lo = (a - hi.astype(jnp.float32)).astype(jnp.bfloat16)
    return hi, lo


def _mm_3pass(a, b):
    """~f32-accurate matmul (rel err ~4e-6) as 3 bf16 MXU passes."""
    a_hi, a_lo = _split_bf16(a)
    b_hi, b_lo = _split_bf16(b)
    acc = jnp.dot(a_hi, b_hi, preferred_element_type=jnp.float32)
    acc = acc + jnp.dot(a_lo, b_hi, preferred_element_type=jnp.float32)
    acc = acc + jnp.dot(a_hi, b_lo, preferred_element_type=jnp.float32)
    return acc


def _pinn_kernel(x_ref, p_ref, o_ref):
    # Fused 4-layer MLP in the natural (batch-on-sublanes) layout:
    #   (tile, 3) -> (tile, 40) -> (tile, 40) -> (tile, 40) -> (tile, 2)
    x = x_ref[...]                                   # (tile, 3) f32

    # Layer 1 (K=3): three VPU broadcast-FMAs, keeps the MXU free.
    w1t = p_ref[_R_W1:_R_W1 + 8, :]                  # (8, 40); rows 0..2 = W1^T
    b1 = p_ref[_R_B1:_R_B1 + 1, :]                   # (1, 40)
    h = (b1
         + x[:, 0:1] * w1t[0:1, :]
         + x[:, 1:2] * w1t[1:2, :]
         + x[:, 2:3] * w1t[2:3, :])                  # (tile, 40)
    h = jnp.tanh(h)

    # Layers 2 & 3: 40x40 MXU matmuls via the 3-pass bf16 split.
    h = jnp.tanh(_mm_3pass(h, p_ref[_R_W2:_R_W2 + 40, :])
                 + p_ref[_R_B2:_R_B2 + 1, :])
    h = jnp.tanh(_mm_3pass(h, p_ref[_R_W3:_R_W3 + 40, :])
                 + p_ref[_R_B3:_R_B3 + 1, :])

    # Layer 4: W4^T is stored zero-padded to 40 output cols; only cols 0:2 used.
    y = _mm_3pass(h, p_ref[_R_W4:_R_W4 + 40, :]) + p_ref[_R_B4:_R_B4 + 1, :]
    o_ref[...] = y[:, 0:2].astype(o_ref.dtype)       # (tile, 2)


def pack_params(p):
    """One-time packing of the 8 PyTorch-layout tensors into a (160, 40) f32
    buffer (single resident DMA window in the kernel).  Call outside the hot
    path (params only change once per optimizer step)."""
    buf = jnp.zeros((_P_ROWS, _P_COLS), jnp.float32)
    buf = buf.at[_R_W1:_R_W1 + 3, :].set(p["w1"].T)        # (3, 40)
    buf = buf.at[_R_B1, :].set(p["b1"])
    buf = buf.at[_R_W2:_R_W2 + 40, :].set(p["w2"].T)       # (40, 40)
    buf = buf.at[_R_B2, :].set(p["b2"])
    buf = buf.at[_R_W3:_R_W3 + 40, :].set(p["w3"].T)       # (40, 40)
    buf = buf.at[_R_B3, :].set(p["b3"])
    buf = buf.at[_R_W4:_R_W4 + 40, 0:2].set(p["w4"].T)     # (40, 2) zero-padded
    buf = buf.at[_R_B4, 0:2].set(p["b4"])
    return buf


def _pick_tile(n, tm_req):
    tile = max(1, min(int(tm_req), n))
    if tile < n:
        # Multi-block: sublane-aligned tile; last (ragged) block is masked.
        tile = max(8, (tile // 8) * 8)
    elif n >= 256:
        # v7x megacore: guarantee >= 2 grid steps so the "parallel" axis
        # can shard across both TensorCores.
        tile = max(8, -(-((n + 1) // 2) // 8) * 8)
    return tile


def allen_cahn_pinn_forward(x, params, *, packed=None, tm=1024):
    """x: (N, 3) f32. params: PyTorch-layout weights/biases + mu.
    Returns (y, mu) with y shaped (N, 2), matching the nn.Module forward."""
    n, fin = x.shape
    assert fin == 3
    if packed is None:
        packed = pack_params(params)

    tile = _pick_tile(n, tm)
    grid = (pl.cdiv(n, tile),)

    cost = pl.CostEstimate(
        flops=2 * n * (3 * 40 + 40 * 40 + 40 * 40 + 40 * 2),
        transcendentals=n * 120,
        bytes_accessed=n * (3 + 2) * 4 + _P_ROWS * _P_COLS * 4,
    )

    y = pl.pallas_call(
        _pinn_kernel,
        out_shape=jax.ShapeDtypeStruct((n, 2), jnp.float32),
        grid_spec=pltpu.PrefetchScalarGridSpec(
            num_scalar_prefetch=0,
            grid=grid,
            in_specs=[
                pl.BlockSpec((tile, 3), lambda i: (i, 0)),          # x rows
                pl.BlockSpec((_P_ROWS, _P_COLS), lambda i: (0, 0)),  # params
            ],
            out_specs=pl.BlockSpec((tile, 2), lambda i: (i, 0)),
        ),
        compiler_params=pltpu.CompilerParams(
            dimension_semantics=("parallel",)),
        cost_estimate=cost,
    )(x, packed)

    return y, params["mu"]


def init_params(key):
    """Deterministic init mirroring the PyTorch module (PyTorch (out,in) layout).

    Layers 1-3 weights: kaiming_normal_(mode='fan_out', nonlinearity='tanh')
      => std = gain / sqrt(fan_out), gain = 5/3.
    Layer 4 weight + all biases: PyTorch Linear default
      uniform(-1/sqrt(fan_in), 1/sqrt(fan_in)).
    """
    ks = jax.random.split(key, 8)
    gain = 5.0 / 3.0

    def kaiming_fan_out(k, fan_in, fan_out):
        std = gain / math.sqrt(fan_out)
        return jax.random.normal(k, (fan_out, fan_in), jnp.float32) * std

    def default_uniform(k, shape, fan_in):
        bound = 1.0 / math.sqrt(fan_in)
        return jax.random.uniform(k, shape, jnp.float32, -bound, bound)

    return {
        "w1": kaiming_fan_out(ks[0], 3, 40),        # (40, 3)
        "b1": default_uniform(ks[1], (40,), 3),
        "w2": kaiming_fan_out(ks[2], 40, 40),       # (40, 40)
        "b2": default_uniform(ks[3], (40,), 40),
        "w3": kaiming_fan_out(ks[4], 40, 40),       # (40, 40)
        "b3": default_uniform(ks[5], (40,), 40),
        "w4": default_uniform(ks[6], (2, 40), 40),  # (2, 40)
        "b4": default_uniform(ks[7], (2,), 40),
        "mu": jnp.asarray(2.0, jnp.float32),
    }


def reference_forward(x, p):
    hp = jax.lax.Precision.HIGHEST
    h = jnp.tanh(jnp.dot(x, p["w1"].T, precision=hp) + p["b1"])
    h = jnp.tanh(jnp.dot(h, p["w2"].T, precision=hp) + p["b2"])
    h = jnp.tanh(jnp.dot(h, p["w3"].T, precision=hp) + p["b3"])
    return jnp.dot(h, p["w4"].T, precision=hp) + p["b4"], p["mu"]


if __name__ == "__main__":
    key = jax.random.PRNGKey(0)
    kx, kp = jax.random.split(key)

    N = 64  # collocation points (batch); features = (x, y, t) -> 3
    x = jax.random.normal(kx, (N, 3), jnp.float32)
    params = init_params(kp)
    packed = pack_params(params)   # one-time packing, outside the hot path

    y, mu = allen_cahn_pinn_forward(x, params, packed=packed)
    y = jax.block_until_ready(y)

    y_ref, _ = reference_forward(x, params)
    assert y.shape == (N, 2)
    assert jnp.allclose(y, y_ref, atol=1e-5, rtol=1e-5), "mismatch vs reference"
    assert float(mu) == 2.0

    print("KERNEL_OK")
</pallas_src>

<mosaic_0001>
module attributes {stable_mosaic.version = 11 : i64} {
  func.func @_pinn_kernel(%arg0: i32, %arg1: memref<64x3xf32, #tpu.memory_space<vmem>>, %arg2: memref<160x40xf32, #tpu.memory_space<vmem>>, %arg3: memref<64x2xf32, #tpu.memory_space<vmem>>) attributes {dimension_semantics = [#tpu.dimension_semantics<parallel>], iteration_bounds = array<i64: 1>, scalar_prefetch = 0 : i64, scratch_operands = 0 : i64, tpu.core_type = #tpu.core_type<tc>, window_params = [{transform_indices = @transform_0, window_bounds = array<i64: 64, 3>}, {pipeline_mode = #tpu.pipeline_mode<synchronous>, transform_indices = @transform_1, window_bounds = array<i64: 160, 40>}, {transform_indices = @transform_2, window_bounds = array<i64: 64, 2>}]} {
    %c0 = arith.constant 0 : index
    %c0_0 = arith.constant 0 : index
    %0 = vector.load %arg1[%c0, %c0_0] : memref<64x3xf32, #tpu.memory_space<vmem>>, vector<64x3xf32>
    %c0_1 = arith.constant 0 : index
    %c0_2 = arith.constant 0 : index
    %1 = vector.load %arg2[%c0_1, %c0_2] : memref<160x40xf32, #tpu.memory_space<vmem>>, vector<8x40xf32>
    %c8 = arith.constant 8 : index
    %c0_3 = arith.constant 0 : index
    %2 = vector.load %arg2[%c8, %c0_3] : memref<160x40xf32, #tpu.memory_space<vmem>>, vector<1x40xf32>
    %3 = vector.extract_strided_slice %0 {offsets = [0, 0], sizes = [64, 1], strides = [1, 1]} : vector<64x3xf32> to vector<64x1xf32>
    %4 = vector.extract_strided_slice %1 {offsets = [0, 0], sizes = [1, 40], strides = [1, 1]} : vector<8x40xf32> to vector<1x40xf32>
    %5 = vector.broadcast %3 : vector<64x1xf32> to vector<64x40xf32>
    %6 = vector.broadcast %4 : vector<1x40xf32> to vector<64x40xf32>
    %7 = arith.mulf %5, %6 : vector<64x40xf32>
    %8 = vector.broadcast %2 : vector<1x40xf32> to vector<64x40xf32>
    %9 = arith.addf %8, %7 : vector<64x40xf32>
    %10 = vector.extract_strided_slice %0 {offsets = [0, 1], sizes = [64, 1], strides = [1, 1]} : vector<64x3xf32> to vector<64x1xf32>
    %11 = vector.extract_strided_slice %1 {offsets = [1, 0], sizes = [1, 40], strides = [1, 1]} : vector<8x40xf32> to vector<1x40xf32>
    %12 = vector.broadcast %10 : vector<64x1xf32> to vector<64x40xf32>
    %13 = vector.broadcast %11 : vector<1x40xf32> to vector<64x40xf32>
    %14 = arith.mulf %12, %13 : vector<64x40xf32>
    %15 = arith.addf %9, %14 : vector<64x40xf32>
    %16 = vector.extract_strided_slice %0 {offsets = [0, 2], sizes = [64, 1], strides = [1, 1]} : vector<64x3xf32> to vector<64x1xf32>
    %17 = vector.extract_strided_slice %1 {offsets = [2, 0], sizes = [1, 40], strides = [1, 1]} : vector<8x40xf32> to vector<1x40xf32>
    %18 = vector.broadcast %16 : vector<64x1xf32> to vector<64x40xf32>
    %19 = vector.broadcast %17 : vector<1x40xf32> to vector<64x40xf32>
    %20 = arith.mulf %18, %19 : vector<64x40xf32>
    %21 = arith.addf %15, %20 : vector<64x40xf32>
    %22 = math.tanh %21 : vector<64x40xf32>
    %c16 = arith.constant 16 : index
    %c0_4 = arith.constant 0 : index
    %23 = vector.load %arg2[%c16, %c0_4] : memref<160x40xf32, #tpu.memory_space<vmem>>, vector<40x40xf32>
    %24 = arith.truncf %22 : vector<64x40xf32> to vector<64x40xbf16>
    %25 = arith.extf %24 : vector<64x40xbf16> to vector<64x40xf32>
    %26 = arith.subf %22, %25 : vector<64x40xf32>
    %27 = arith.truncf %26 : vector<64x40xf32> to vector<64x40xbf16>
    %28 = arith.truncf %23 : vector<40x40xf32> to vector<40x40xbf16>
    %29 = arith.extf %28 : vector<40x40xbf16> to vector<40x40xf32>
    %30 = arith.subf %23, %29 : vector<40x40xf32>
    %31 = arith.truncf %30 : vector<40x40xf32> to vector<40x40xbf16>
    %cst = arith.constant dense<0.000000e+00> : vector<64x40xf32>
    %32 = tpu.matmul %24, %28, %cst {dimension_numbers = #tpu.dot_dimension_numbers<[1], [0], [0], [1], [0, 0, 1, 1], [], []>} : vector<64x40xbf16>, vector<40x40xbf16>, vector<64x40xf32> -> vector<64x40xf32>
    %cst_5 = arith.constant dense<0.000000e+00> : vector<64x40xf32>
    %33 = tpu.matmul %27, %28, %cst_5 {dimension_numbers = #tpu.dot_dimension_numbers<[1], [0], [0], [1], [0, 0, 1, 1], [], []>} : vector<64x40xbf16>, vector<40x40xbf16>, vector<64x40xf32> -> vector<64x40xf32>
    %34 = arith.addf %32, %33 : vector<64x40xf32>
    %cst_6 = arith.constant dense<0.000000e+00> : vector<64x40xf32>
    %35 = tpu.matmul %24, %31, %cst_6 {dimension_numbers = #tpu.dot_dimension_numbers<[1], [0], [0], [1], [0, 0, 1, 1], [], []>} : vector<64x40xbf16>, vector<40x40xbf16>, vector<64x40xf32> -> vector<64x40xf32>
    %36 = arith.addf %34, %35 : vector<64x40xf32>
    %c56 = arith.constant 56 : index
    %c0_7 = arith.constant 0 : index
    %37 = vector.load %arg2[%c56, %c0_7] : memref<160x40xf32, #tpu.memory_space<vmem>>, vector<1x40xf32>
    %38 = vector.broadcast %37 : vector<1x40xf32> to vector<64x40xf32>
    %39 = arith.addf %36, %38 : vector<64x40xf32>
    %40 = math.tanh %39 : vector<64x40xf32>
    %c64 = arith.constant 64 : index
    %c0_8 = arith.constant 0 : index
    %41 = vector.load %arg2[%c64, %c0_8] : memref<160x40xf32, #tpu.memory_space<vmem>>, vector<40x40xf32>
    %42 = arith.truncf %40 : vector<64x40xf32> to vector<64x40xbf16>
    %43 = arith.extf %42 : vector<64x40xbf16> to vector<64x40xf32>
    %44 = arith.subf %40, %43 : vector<64x40xf32>
    %45 = arith.truncf %44 : vector<64x40xf32> to vector<64x40xbf16>
    %46 = arith.truncf %41 : vector<40x40xf32> to vector<40x40xbf16>
    %47 = arith.extf %46 : vector<40x40xbf16> to vector<40x40xf32>
    %48 = arith.subf %41, %47 : vector<40x40xf32>
    %49 = arith.truncf %48 : vector<40x40xf32> to vector<40x40xbf16>
    %cst_9 = arith.constant dense<0.000000e+00> : vector<64x40xf32>
    %50 = tpu.matmul %42, %46, %cst_9 {dimension_numbers = #tpu.dot_dimension_numbers<[1], [0], [0], [1], [0, 0, 1, 1], [], []>} : vector<64x40xbf16>, vector<40x40xbf16>, vector<64x40xf32> -> vector<64x40xf32>
    %cst_10 = arith.constant dense<0.000000e+00> : vector<64x40xf32>
    %51 = tpu.matmul %45, %46, %cst_10 {dimension_numbers = #tpu.dot_dimension_numbers<[1], [0], [0], [1], [0, 0, 1, 1], [], []>} : vector<64x40xbf16>, vector<40x40xbf16>, vector<64x40xf32> -> vector<64x40xf32>
    %52 = arith.addf %50, %51 : vector<64x40xf32>
    %cst_11 = arith.constant dense<0.000000e+00> : vector<64x40xf32>
    %53 = tpu.matmul %42, %49, %cst_11 {dimension_numbers = #tpu.dot_dimension_numbers<[1], [0], [0], [1], [0, 0, 1, 1], [], []>} : vector<64x40xbf16>, vector<40x40xbf16>, vector<64x40xf32> -> vector<64x40xf32>
    %54 = arith.addf %52, %53 : vector<64x40xf32>
    %c104 = arith.constant 104 : index
    %c0_12 = arith.constant 0 : index
    %55 = vector.load %arg2[%c104, %c0_12] : memref<160x40xf32, #tpu.memory_space<vmem>>, vector<1x40xf32>
    %56 = vector.broadcast %55 : vector<1x40xf32> to vector<64x40xf32>
    %57 = arith.addf %54, %56 : vector<64x40xf32>
    %58 = math.tanh %57 : vector<64x40xf32>
    %c112 = arith.constant 112 : index
    %c0_13 = arith.constant 0 : index
    %59 = vector.load %arg2[%c112, %c0_13] : memref<160x40xf32, #tpu.memory_space<vmem>>, vector<40x40xf32>
    %60 = arith.truncf %58 : vector<64x40xf32> to vector<64x40xbf16>
    %61 = arith.extf %60 : vector<64x40xbf16> to vector<64x40xf32>
    %62 = arith.subf %58, %61 : vector<64x40xf32>
    %63 = arith.truncf %62 : vector<64x40xf32> to vector<64x40xbf16>
    %64 = arith.truncf %59 : vector<40x40xf32> to vector<40x40xbf16>
    %65 = arith.extf %64 : vector<40x40xbf16> to vector<40x40xf32>
    %66 = arith.subf %59, %65 : vector<40x40xf32>
    %67 = arith.truncf %66 : vector<40x40xf32> to vector<40x40xbf16>
    %cst_14 = arith.constant dense<0.000000e+00> : vector<64x40xf32>
    %68 = tpu.matmul %60, %64, %cst_14 {dimension_numbers = #tpu.dot_dimension_numbers<[1], [0], [0], [1], [0, 0, 1, 1], [], []>} : vector<64x40xbf16>, vector<40x40xbf16>, vector<64x40xf32> -> vector<64x40xf32>
    %cst_15 = arith.constant dense<0.000000e+00> : vector<64x40xf32>
    %69 = tpu.matmul %63, %64, %cst_15 {dimension_numbers = #tpu.dot_dimension_numbers<[1], [0], [0], [1], [0, 0, 1, 1], [], []>} : vector<64x40xbf16>, vector<40x40xbf16>, vector<64x40xf32> -> vector<64x40xf32>
    %70 = arith.addf %68, %69 : vector<64x40xf32>
    %cst_16 = arith.constant dense<0.000000e+00> : vector<64x40xf32>
    %71 = tpu.matmul %60, %67, %cst_16 {dimension_numbers = #tpu.dot_dimension_numbers<[1], [0], [0], [1], [0, 0, 1, 1], [], []>} : vector<64x40xbf16>, vector<40x40xbf16>, vector<64x40xf32> -> vector<64x40xf32>
    %72 = arith.addf %70, %71 : vector<64x40xf32>
    %c152 = arith.constant 152 : index
    %c0_17 = arith.constant 0 : index
    %73 = vector.load %arg2[%c152, %c0_17] : memref<160x40xf32, #tpu.memory_space<vmem>>, vector<1x40xf32>
    %74 = vector.broadcast %73 : vector<1x40xf32> to vector<64x40xf32>
    %75 = arith.addf %72, %74 : vector<64x40xf32>
    %76 = vector.extract_strided_slice %75 {offsets = [0, 0], sizes = [64, 2], strides = [1, 1]} : vector<64x40xf32> to vector<64x2xf32>
    %c0_18 = arith.constant 0 : index
    %c0_19 = arith.constant 0 : index
    %77 = vector.load %arg3[%c0_18, %c0_19] : memref<64x2xf32, #tpu.memory_space<vmem>>, vector<64x2xf32>
    tpu.vector_store %arg3[%c0_18, %c0_19], %76 {strides = array<i32>} : memref<64x2xf32, #tpu.memory_space<vmem>>, vector<64x2xf32>,
    return
  }
  func.func @transform_0(%arg0: i32) -> (i32, i32) {
    %c0_i32 = arith.constant 0 : i32
    %c0_i32_0 = arith.constant 0 : i32
    return %arg0, %c0_i32 : i32, i32
  }
  func.func @transform_1(%arg0: i32) -> (i32, i32) {
    %c0_i32 = arith.constant 0 : i32
    %c0_i32_0 = arith.constant 0 : i32
    %c0_i32_1 = arith.constant 0 : i32
    return %c0_i32, %c0_i32_0 : i32, i32
  }
  func.func @transform_2(%arg0: i32) -> (i32, i32) {
    %c0_i32 = arith.constant 0 : i32
    %c0_i32_0 = arith.constant 0 : i32
    return %arg0, %c0_i32 : i32, i32
  }
}

</mosaic_0001>

<llo_original>
// kernel: tpu_custom_call.1
$region0: #{tpu_custom_call.1}
  #allocation0 [shape = 'u32[]', space=smem, size = 0x4, offset = 0x4, fixed_abs, tag = 'smem constant byte address 0x4 - core index']
  #allocation1 [shape = 'u32[72,128]{1,0:T(1,128)}', space=vmem, size = 0x9000, scoped, tag = 'internal scratch']
  %s0 = inlined_call_operand.vmem [shape: f32[64,3], index: 0, kind: input, shape index: {}]
  %s1 = inlined_call_operand.vmem [shape: f32[160,40], index: 1, kind: input, shape index: {}]
  %s2 = inlined_call_operand.vmem [shape: f32[64,2], index: 2, kind: output, shape index: {}]
  %s3 = sld [smem:[#allocation0]]
  $region18: #{tpu_custom_call.1} parent=0
    _
  %s5 = ssub.s32 1, %s3
  %s6 = scalar_select 0, %s5, %s3
  // Predicated region
  $region2: #{tpu_custom_call.1} parent=0 // pred_check
    _
  $region3: #{tpu_custom_call.1} parent=0 // pred_check_branch
    %8 = sbr.rel (0) target = $region5
  $region4: #{tpu_custom_call.1} parent=0 // pred_region
    _
  $region5: #{tpu_custom_call.1} parent=0 // pred_fallthru
    _
  // Predicated region
  $region6: #{tpu_custom_call.1} parent=0 // pred_check
    _
  $region7: #{tpu_custom_call.1} parent=0 // pred_check_branch
    %10 = sbr.rel (0) target = $region9
  $region8: #{tpu_custom_call.1} parent=0 // pred_region
    _
  $region9: #{tpu_custom_call.1} parent=0 // pred_fallthru
    _
  %v12 = vld [vmem:[%s0] sm:$0xff]
  %v13 = vld [vmem:[%s0 + $0x8] sm:$0xff]
  %v14 = vld [vmem:[%s0 + $0x10] sm:$0xff]
  %v15 = vld [vmem:[%s0 + $0x18] sm:$0xff]
  %v16 = vld [vmem:[%s0 + $0x20] sm:$0xff]
  %v17 = vld [vmem:[%s0 + $0x28] sm:$0xff]
  %v18 = vld [vmem:[%s0 + $0x30] sm:$0xff]
  %v19 = vld [vmem:[%s0 + $0x38] sm:$0xff]
  %v20 = vld [vmem:[%s1] sm:$0xff]
  %v21 = vld [vmem:[%s1 + $0x8] sm:$0x1]
  %23 = vset.pattern.permute.xlu0 0
  %24 = vperm.xlu0 %23, %v12
  %v25 = vpop.permute.xlu0 %24
  %28 = vset.pattern.permute.xlu0 0
  %29 = vperm.xlu0 %28, %v13
  %v30 = vpop.permute.xlu0 %29
  %33 = vset.pattern.permute.xlu0 0
  %34 = vperm.xlu0 %33, %v14
  %v35 = vpop.permute.xlu0 %34
  %38 = vset.pattern.permute.xlu0 0
  %39 = vperm.xlu0 %38, %v15
  %v40 = vpop.permute.xlu0 %39
  %43 = vset.pattern.permute.xlu0 0
  %44 = vperm.xlu0 %43, %v16
  %v45 = vpop.permute.xlu0 %44
  %48 = vset.pattern.permute.xlu0 0
  %49 = vperm.xlu0 %48, %v17
  %v50 = vpop.permute.xlu0 %49
  %53 = vset.pattern.permute.xlu0 0
  %54 = vperm.xlu0 %53, %v18
  %v55 = vpop.permute.xlu0 %54
  %58 = vset.pattern.permute.xlu0 0
  %59 = vperm.xlu0 %58, %v19
  %v60 = vpop.permute.xlu0 %59
  %v62 = vperm.slane %v20, 0
  %v63 = vmul.f32 %v25, %v62
  %v64 = vmul.f32 %v30, %v62
  %v65 = vmul.f32 %v35, %v62
  %v66 = vmul.f32 %v40, %v62
  %v67 = vmul.f32 %v45, %v62
  %v68 = vmul.f32 %v50, %v62
  %v69 = vmul.f32 %v55, %v62
  %v70 = vmul.f32 %v60, %v62
  %v71 = vperm.slane %v21, 0
  %v72 = vadd.f32 %v71, %v63
  %v73 = vadd.f32 %v71, %v64
  %v74 = vadd.f32 %v71, %v65
  %v75 = vadd.f32 %v71, %v66
  %v76 = vadd.f32 %v71, %v67
  %v77 = vadd.f32 %v71, %v68
  %v78 = vadd.f32 %v71, %v69
  %v79 = vadd.f32 %v71, %v70
  %80 = vset.pattern.permute.xlu0 1
  %81 = vperm.xlu0 %80, %v12
  %v82 = vpop.permute.xlu0 %81
  %84 = vset.pattern.permute.xlu0 1
  %85 = vperm.xlu0 %84, %v13
  %v86 = vpop.permute.xlu0 %85
  %88 = vset.pattern.permute.xlu0 1
  %89 = vperm.xlu0 %88, %v14
  %v90 = vpop.permute.xlu0 %89
  %92 = vset.pattern.permute.xlu0 1
  %93 = vperm.xlu0 %92, %v15
  %v94 = vpop.permute.xlu0 %93
  %96 = vset.pattern.permute.xlu0 1
  %97 = vperm.xlu0 %96, %v16
  %v98 = vpop.permute.xlu0 %97
  %100 = vset.pattern.permute.xlu0 1
  %101 = vperm.xlu0 %100, %v17
  %v102 = vpop.permute.xlu0 %101
  %104 = vset.pattern.permute.xlu0 1
  %105 = vperm.xlu0 %104, %v18
  %v106 = vpop.permute.xlu0 %105
  %108 = vset.pattern.permute.xlu0 1
  %109 = vperm.xlu0 %108, %v19
  %v110 = vpop.permute.xlu0 %109
  %v112 = vperm.slane %v20, 1
  %v113 = vmul.f32 %v82, %v112
  %v114 = vmul.f32 %v86, %v112
  %v115 = vmul.f32 %v90, %v112
  %v116 = vmul.f32 %v94, %v112
  %v117 = vmul.f32 %v98, %v112
  %v118 = vmul.f32 %v102, %v112
  %v119 = vmul.f32 %v106, %v112
  %v120 = vmul.f32 %v110, %v112
  %v121 = vadd.f32 %v72, %v113
  %v122 = vadd.f32 %v73, %v114
  %v123 = vadd.f32 %v74, %v115
  %v124 = vadd.f32 %v75, %v116
  %v125 = vadd.f32 %v76, %v117
  %v126 = vadd.f32 %v77, %v118
  %v127 = vadd.f32 %v78, %v119
  %v128 = vadd.f32 %v79, %v120
  %129 = vset.pattern.permute.xlu0 2
  %130 = vperm.xlu0 %129, %v12
  %v131 = vpop.permute.xlu0 %130
  %133 = vset.pattern.permute.xlu0 2
  %134 = vperm.xlu0 %133, %v13
  %v135 = vpop.permute.xlu0 %134
  %137 = vset.pattern.permute.xlu0 2
  %138 = vperm.xlu0 %137, %v14
  %v139 = vpop.permute.xlu0 %138
  %141 = vset.pattern.permute.xlu0 2
  %142 = vperm.xlu0 %141, %v15
  %v143 = vpop.permute.xlu0 %142
  %145 = vset.pattern.permute.xlu0 2
  %146 = vperm.xlu0 %145, %v16
  %v147 = vpop.permute.xlu0 %146
  %149 = vset.pattern.permute.xlu0 2
  %150 = vperm.xlu0 %149, %v17
  %v151 = vpop.permute.xlu0 %150
  %153 = vset.pattern.permute.xlu0 2
  %154 = vperm.xlu0 %153, %v18
  %v155 = vpop.permute.xlu0 %154
  %157 = vset.pattern.permute.xlu0 2
  %158 = vperm.xlu0 %157, %v19
  %v159 = vpop.permute.xlu0 %158
  %v161 = vperm.slane %v20, 2
  %v162 = vmul.f32 %v131, %v161
  %v163 = vmul.f32 %v135, %v161
  %v164 = vmul.f32 %v139, %v161
  %v165 = vmul.f32 %v143, %v161
  %v166 = vmul.f32 %v147, %v161
  %v167 = vmul.f32 %v151, %v161
  %v168 = vmul.f32 %v155, %v161
  %v169 = vmul.f32 %v159, %v161
  %v170 = vadd.f32 %v121, %v162
  %v171 = vadd.f32 %v122, %v163
  %v172 = vadd.f32 %v123, %v164
  %v173 = vadd.f32 %v124, %v165
  %v174 = vadd.f32 %v125, %v166
  %v175 = vadd.f32 %v126, %v167
  %v176 = vadd.f32 %v127, %v168
  %v177 = vadd.f32 %v128, %v169
  %v178 = vtanh.pop %v170
  %v179 = vtanh.pop %v171
  %v180 = vtanh.pop %v172
  %v181 = vtanh.pop %v173
  %v182 = vtanh.pop %v174
  %v183 = vtanh.pop %v175
  %v184 = vtanh.pop %v176
  %v185 = vtanh.pop %v177
  %v186 = vld [vmem:[%s1 + $0x10] sm:$0xff]
  %v187 = vld [vmem:[%s1 + $0x18] sm:$0xff]
  %v188 = vld [vmem:[%s1 + $0x20] sm:$0xff]
  %v189 = vld [vmem:[%s1 + $0x28] sm:$0xff]
  %v190 = vld [vmem:[%s1 + $0x30] sm:$0xff]
  %v191 = vpack.c.bf16 %v178, %v178
  %v192 = vpack.c.bf16 %v179, %v179
  %v193 = vpack.c.bf16 %v180, %v180
  %v194 = vpack.c.bf16 %v181, %v181
  %v195 = vpack.c.bf16 %v182, %v182
  %v196 = vpack.c.bf16 %v183, %v183
  %v197 = vpack.c.bf16 %v184, %v184
  %v198 = vpack.c.bf16 %v185, %v185
  %v199 = vunpack.c.l.bf16 %v191
  %v200 = vunpack.c.l.bf16 %v192
  %v201 = vunpack.c.l.bf16 %v193
  %v202 = vunpack.c.l.bf16 %v194
  %v203 = vunpack.c.l.bf16 %v195
  %v204 = vunpack.c.l.bf16 %v196
  %v205 = vunpack.c.l.bf16 %v197
  %v206 = vunpack.c.l.bf16 %v198
  %v207 = vsub.f32 %v178, %v199
  %v208 = vsub.f32 %v179, %v200
  %v209 = vsub.f32 %v180, %v201
  %v210 = vsub.f32 %v181, %v202
  %v211 = vsub.f32 %v182, %v203
  %v212 = vsub.f32 %v183, %v204
  %v213 = vsub.f32 %v184, %v205
  %v214 = vsub.f32 %v185, %v206
  %v215 = vpack.c.bf16 %v208, %v207
  %v216 = vpack.c.bf16 %v210, %v209
  %v217 = vpack.c.bf16 %v212, %v211
  %v218 = vpack.c.bf16 %v214, %v213
  %v219 = vpack.c.bf16 %v186, %v186
  %v220 = vpack.c.bf16 %v187, %v187
  %v221 = vpack.c.bf16 %v188, %v188
  %v222 = vpack.c.bf16 %v189, %v189
  %v223 = vpack.c.bf16 %v190, %v190
  %v224 = vunpack.c.l.bf16 %v219
  %v225 = vunpack.c.l.bf16 %v220
  %v226 = vunpack.c.l.bf16 %v221
  %v227 = vunpack.c.l.bf16 %v222
  %v228 = vunpack.c.l.bf16 %v223
  %v229 = vsub.f32 %v186, %v224
  %v230 = vsub.f32 %v187, %v225
  %v231 = vsub.f32 %v188, %v226
  %v232 = vsub.f32 %v189, %v227
  %v233 = vsub.f32 %v190, %v228
  %v234 = vpack.c.bf16 %v230, %v229
  %v235 = vpack.c.bf16 %v232, %v231
  %v236 = vpack.c.bf16 %v233, %v233
  %v242 = vunpack.c.l.b16 %v219
  %v243 = vunpack.c.l.b16 %v220
  %v244 = vunpack.c.l.b16 %v221
  %v245 = vunpack.c.l.b16 %v222
  %v246 = vunpack.c.l.b16 %v223
  %v247 = vpack.c.b16 %v243, %v242
  %v248 = vpack.c.b16 %v245, %v244
  %v249 = vpack.c.b16 %v246, %v246
  %vm252 = vcmask 326656
  %v254 = vsel %vm252, %v215, 0
  %v257 = vsel %vm252, %v216, 0
  %v260 = vsel %vm252, %v217, 0
  %v263 = vsel %vm252, %v218, 0
  %vm265 = vcmask 1043456
  %v267 = vsel %vm265, %v249, 0
  %269 = vmatpush.bf16.msra.mxu0 0
  %270 = vmatpush.bf16.msra.mxu0 0
  %271 = vmatpush.bf16.msra.mxu0 0
  %272 = vmatpush.bf16.msra.mxu0 0
  %273 = vmatpush.bf16.msra.mxu0 0
  %274 = vmatpush.bf16.msra.mxu0 %v267
  %275 = vmatpush.bf16.msra.mxu0 %v248
  %276 = vmatpush.bf16.msra.mxu0 %v247
  %277 = vmatmul.bf16.gmra.mxu0 %v254
  %v278 = vpop.f32.mrf.mxu0
  %v279 = vadd.f32 0.0, %v278
  %v280 = vpop.f32.mrf.mxu0
  %v281 = vadd.f32 0.0, %v280
  %282 = vmatmul.bf16.gmra.mxu0 %v257
  %v283 = vpop.f32.mrf.mxu0
  %v284 = vadd.f32 0.0, %v283
  %v285 = vpop.f32.mrf.mxu0
  %v286 = vadd.f32 0.0, %v285
  %287 = vmatmul.bf16.gmra.mxu0 %v260
  %v288 = vpop.f32.mrf.mxu0
  %v289 = vadd.f32 0.0, %v288
  %v290 = vpop.f32.mrf.mxu0
  %v291 = vadd.f32 0.0, %v290
  %292 = vmatmul.bf16.gmra.mxu0 %v263
  %v293 = vpop.f32.mrf.mxu0
  %v294 = vadd.f32 0.0, %v293
  %v295 = vpop.f32.mrf.mxu0
  %v296 = vadd.f32 0.0, %v295
  %297 = vdwg.mxu0
  %v306 = vunpack.c.l.b16 %v191
  %v307 = vunpack.c.l.b16 %v192
  %v308 = vunpack.c.l.b16 %v193
  %v309 = vunpack.c.l.b16 %v194
  %v310 = vunpack.c.l.b16 %v195
  %v311 = vunpack.c.l.b16 %v196
  %v312 = vunpack.c.l.b16 %v197
  %v313 = vunpack.c.l.b16 %v198
  %v314 = vpack.c.b16 %v307, %v306
  %v315 = vpack.c.b16 %v309, %v308
  %v316 = vpack.c.b16 %v311, %v310
  %v317 = vpack.c.b16 %v313, %v312
  %v319 = vsel %vm252, %v314, 0
  %v322 = vsel %vm252, %v315, 0
  %v325 = vsel %vm252, %v316, 0
  %v328 = vsel %vm252, %v317, 0
  %330 = vmatpush.bf16.msra.mxu0 0
  %331 = vmatpush.bf16.msra.mxu0 0
  %332 = vmatpush.bf16.msra.mxu0 0
  %333 = vmatpush.bf16.msra.mxu0 0
  %334 = vmatpush.bf16.msra.mxu0 0
  %335 = vmatpush.bf16.msra.mxu0 %v267
  %336 = vmatpush.bf16.msra.mxu0 %v248
  %337 = vmatpush.bf16.msra.mxu0 %v247
  %338 = vmatmul.bf16.gmra.mxu0 %v319
  %v339 = vpop.f32.mrf.mxu0
  %v340 = vadd.f32 %v279, %v339
  %v341 = vpop.f32.mrf.mxu0
  %v342 = vadd.f32 %v281, %v341
  %343 = vmatmul.bf16.gmra.mxu0 %v322
  %v344 = vpop.f32.mrf.mxu0
  %v345 = vadd.f32 %v284, %v344
  %v346 = vpop.f32.mrf.mxu0
  %v347 = vadd.f32 %v286, %v346
  %348 = vmatmul.bf16.gmra.mxu0 %v325
  %v349 = vpop.f32.mrf.mxu0
  %v350 = vadd.f32 %v289, %v349
  %v351 = vpop.f32.mrf.mxu0
  %v352 = vadd.f32 %v291, %v351
  %353 = vmatmul.bf16.gmra.mxu0 %v328
  %v354 = vpop.f32.mrf.mxu0
  %v355 = vadd.f32 %v294, %v354
  %v356 = vpop.f32.mrf.mxu0
  %v357 = vadd.f32 %v296, %v356
  %358 = vdwg.mxu0
  %v360 = vsel %vm265, %v236, 0
  %362 = vmatpush.bf16.msra.mxu0 0
  %363 = vmatpush.bf16.msra.mxu0 0
  %364 = vmatpush.bf16.msra.mxu0 0
  %365 = vmatpush.bf16.msra.mxu0 0
  %366 = vmatpush.bf16.msra.mxu0 0
  %367 = vmatpush.bf16.msra.mxu0 %v360
  %368 = vmatpush.bf16.msra.mxu0 %v235
  %369 = vmatpush.bf16.msra.mxu0 %v234
  %370 = vmatmul.bf16.gmra.mxu0 %v319
  %v371 = vpop.f32.mrf.mxu0
  %v372 = vadd.f32 0.0, %v371
  %v373 = vpop.f32.mrf.mxu0
  %v374 = vadd.f32 0.0, %v373
  %375 = vmatmul.bf16.gmra.mxu0 %v322
  %v376 = vpop.f32.mrf.mxu0
  %v377 = vadd.f32 0.0, %v376
  %v378 = vpop.f32.mrf.mxu0
  %v379 = vadd.f32 0.0, %v378
  %380 = vmatmul.bf16.gmra.mxu0 %v325
  %v381 = vpop.f32.mrf.mxu0
  %v382 = vadd.f32 0.0, %v381
  %v383 = vpop.f32.mrf.mxu0
  %v384 = vadd.f32 0.0, %v383
  %385 = vmatmul.bf16.gmra.mxu0 %v328
  %v386 = vpop.f32.mrf.mxu0
  %v387 = vadd.f32 0.0, %v386
  %v388 = vpop.f32.mrf.mxu0
  %v389 = vadd.f32 0.0, %v388
  %390 = vdwg.mxu0
  %v391 = vadd.f32 %v340, %v372
  %v392 = vadd.f32 %v342, %v374
  %v393 = vadd.f32 %v345, %v377
  %v394 = vadd.f32 %v347, %v379
  %v395 = vadd.f32 %v350, %v382
  %v396 = vadd.f32 %v352, %v384
  %v397 = vadd.f32 %v355, %v387
  %v398 = vadd.f32 %v357, %v389
  %v399 = vld [vmem:[%s1 + $0x38] sm:$0x1]
  %v400 = vperm.slane %v399, 0
  %v401 = vadd.f32 %v391, %v400
  %v402 = vadd.f32 %v392, %v400
  %v403 = vadd.f32 %v393, %v400
  %v404 = vadd.f32 %v394, %v400
  %v405 = vadd.f32 %v395, %v400
  %v406 = vadd.f32 %v396, %v400
  %v407 = vadd.f32 %v397, %v400
  %v408 = vadd.f32 %v398, %v400
  %v409 = vtanh.pop %v401
  %v410 = vtanh.pop %v402
  %v411 = vtanh.pop %v403
  %v412 = vtanh.pop %v404
  %v413 = vtanh.pop %v405
  %v414 = vtanh.pop %v406
  %v415 = vtanh.pop %v407
  %v416 = vtanh.pop %v408
  %v417 = vld [vmem:[%s1 + $0x40] sm:$0xff]
  %v418 = vld [vmem:[%s1 + $0x48] sm:$0xff]
  %v419 = vld [vmem:[%s1 + $0x50] sm:$0xff]
  %v420 = vld [vmem:[%s1 + $0x58] sm:$0xff]
  %v421 = vld [vmem:[%s1 + $0x60] sm:$0xff]
  %v422 = vpack.c.bf16 %v409, %v409
  %v423 = vpack.c.bf16 %v410, %v410
  %v424 = vpack.c.bf16 %v411, %v411
  %v425 = vpack.c.bf16 %v412, %v412
  %v426 = vpack.c.bf16 %v413, %v413
  %v427 = vpack.c.bf16 %v414, %v414
  %v428 = vpack.c.bf16 %v415, %v415
  %v429 = vpack.c.bf16 %v416, %v416
  %v430 = vunpack.c.l.bf16 %v422
  %v431 = vunpack.c.l.bf16 %v423
  %v432 = vunpack.c.l.bf16 %v424
  %v433 = vunpack.c.l.bf16 %v425
  %v434 = vunpack.c.l.bf16 %v426
  %v435 = vunpack.c.l.bf16 %v427
  %v436 = vunpack.c.l.bf16 %v428
  %v437 = vunpack.c.l.bf16 %v429
  %v438 = vsub.f32 %v409, %v430
  %v439 = vsub.f32 %v410, %v431
  %v440 = vsub.f32 %v411, %v432
  %v441 = vsub.f32 %v412, %v433
  %v442 = vsub.f32 %v413, %v434
  %v443 = vsub.f32 %v414, %v435
  %v444 = vsub.f32 %v415, %v436
  %v445 = vsub.f32 %v416, %v437
  %v446 = vpack.c.bf16 %v439, %v438
  %v447 = vpack.c.bf16 %v441, %v440
  %v448 = vpack.c.bf16 %v443, %v442
  %v449 = vpack.c.bf16 %v445, %v444
  %v450 = vpack.c.bf16 %v417, %v417
  %v451 = vpack.c.bf16 %v418, %v418
  %v452 = vpack.c.bf16 %v419, %v419
  %v453 = vpack.c.bf16 %v420, %v420
  %v454 = vpack.c.bf16 %v421, %v421
  %v455 = vunpack.c.l.bf16 %v450
  %v456 = vunpack.c.l.bf16 %v451
  %v457 = vunpack.c.l.bf16 %v452
  %v458 = vunpack.c.l.bf16 %v453
  %v459 = vunpack.c.l.bf16 %v454
  %v460 = vsub.f32 %v417, %v455
  %v461 = vsub.f32 %v418, %v456
  %v462 = vsub.f32 %v419, %v457
  %v463 = vsub.f32 %v420, %v458
  %v464 = vsub.f32 %v421, %v459
  %v465 = vpack.c.bf16 %v461, %v460
  %v466 = vpack.c.bf16 %v463, %v462
  %v467 = vpack.c.bf16 %v464, %v464
  %v473 = vunpack.c.l.b16 %v450
  %v474 = vunpack.c.l.b16 %v451
  %v475 = vunpack.c.l.b16 %v452
  %v476 = vunpack.c.l.b16 %v453
  %v477 = vunpack.c.l.b16 %v454
  %v478 = vpack.c.b16 %v474, %v473
  %v479 = vpack.c.b16 %v476, %v475
  %v480 = vpack.c.b16 %v477, %v477
  %v484 = vsel %vm252, %v446, 0
  %v487 = vsel %vm252, %v447, 0
  %v490 = vsel %vm252, %v448, 0
  %v493 = vsel %vm252, %v449, 0
  %v496 = vsel %vm265, %v480, 0
  %498 = vmatpush.bf16.msra.mxu0 0
  %499 = vmatpush.bf16.msra.mxu0 0
  %500 = vmatpush.bf16.msra.mxu0 0
  %501 = vmatpush.bf16.msra.mxu0 0
  %502 = vmatpush.bf16.msra.mxu0 0
  %503 = vmatpush.bf16.msra.mxu0 %v496
  %504 = vmatpush.bf16.msra.mxu0 %v479
  %505 = vmatpush.bf16.msra.mxu0 %v478
  %506 = vmatmul.bf16.gmra.mxu0 %v484
  %v507 = vpop.f32.mrf.mxu0
  %v508 = vadd.f32 0.0, %v507
  %v509 = vpop.f32.mrf.mxu0
  %v510 = vadd.f32 0.0, %v509
  %511 = vmatmul.bf16.gmra.mxu0 %v487
  %v512 = vpop.f32.mrf.mxu0
  %v513 = vadd.f32 0.0, %v512
  %v514 = vpop.f32.mrf.mxu0
  %v515 = vadd.f32 0.0, %v514
  %516 = vmatmul.bf16.gmra.mxu0 %v490
  %v517 = vpop.f32.mrf.mxu0
  %v518 = vadd.f32 0.0, %v517
  %v519 = vpop.f32.mrf.mxu0
  %v520 = vadd.f32 0.0, %v519
  %521 = vmatmul.bf16.gmra.mxu0 %v493
  %v522 = vpop.f32.mrf.mxu0
  %v523 = vadd.f32 0.0, %v522
  %v524 = vpop.f32.mrf.mxu0
  %v525 = vadd.f32 0.0, %v524
  %526 = vdwg.mxu0
  %v535 = vunpack.c.l.b16 %v422
  %v536 = vunpack.c.l.b16 %v423
  %v537 = vunpack.c.l.b16 %v424
  %v538 = vunpack.c.l.b16 %v425
  %v539 = vunpack.c.l.b16 %v426
  %v540 = vunpack.c.l.b16 %v427
  %v541 = vunpack.c.l.b16 %v428
  %v542 = vunpack.c.l.b16 %v429
  %v543 = vpack.c.b16 %v536, %v535
  %v544 = vpack.c.b16 %v538, %v537
  %v545 = vpack.c.b16 %v540, %v539
  %v546 = vpack.c.b16 %v542, %v541
  %v548 = vsel %vm252, %v543, 0
  %v551 = vsel %vm252, %v544, 0
  %v554 = vsel %vm252, %v545, 0
  %v557 = vsel %vm252, %v546, 0
  %559 = vmatpush.bf16.msra.mxu0 0
  %560 = vmatpush.bf16.msra.mxu0 0
  %561 = vmatpush.bf16.msra.mxu0 0
  %562 = vmatpush.bf16.msra.mxu0 0
  %563 = vmatpush.bf16.msra.mxu0 0
  %564 = vmatpush.bf16.msra.mxu0 %v496
  %565 = vmatpush.bf16.msra.mxu0 %v479
  %566 = vmatpush.bf16.msra.mxu0 %v478
  %567 = vmatmul.bf16.gmra.mxu0 %v548
  %v568 = vpop.f32.mrf.mxu0
  %v569 = vadd.f32 %v508, %v568
  %v570 = vpop.f32.mrf.mxu0
  %v571 = vadd.f32 %v510, %v570
  %572 = vmatmul.bf16.gmra.mxu0 %v551
  %v573 = vpop.f32.mrf.mxu0
  %v574 = vadd.f32 %v513, %v573
  %v575 = vpop.f32.mrf.mxu0
  %v576 = vadd.f32 %v515, %v575
  %577 = vmatmul.bf16.gmra.mxu0 %v554
  %v578 = vpop.f32.mrf.mxu0
  %v579 = vadd.f32 %v518, %v578
  %v580 = vpop.f32.mrf.mxu0
  %v581 = vadd.f32 %v520, %v580
  %582 = vmatmul.bf16.gmra.mxu0 %v557
  %v583 = vpop.f32.mrf.mxu0
  %v584 = vadd.f32 %v523, %v583
  %v585 = vpop.f32.mrf.mxu0
  %v586 = vadd.f32 %v525, %v585
  %587 = vdwg.mxu0
  %v589 = vsel %vm265, %v467, 0
  %591 = vmatpush.bf16.msra.mxu0 0
  %592 = vmatpush.bf16.msra.mxu0 0
  %593 = vmatpush.bf16.msra.mxu0 0
  %594 = vmatpush.bf16.msra.mxu0 0
  %595 = vmatpush.bf16.msra.mxu0 0
  %596 = vmatpush.bf16.msra.mxu0 %v589
  %597 = vmatpush.bf16.msra.mxu0 %v466
  %598 = vmatpush.bf16.msra.mxu0 %v465
  %599 = vmatmul.bf16.gmra.mxu0 %v548
  %v600 = vpop.f32.mrf.mxu0
  %v601 = vadd.f32 0.0, %v600
  %v602 = vpop.f32.mrf.mxu0
  %v603 = vadd.f32 0.0, %v602
  %604 = vmatmul.bf16.gmra.mxu0 %v551
  %v605 = vpop.f32.mrf.mxu0
  %v606 = vadd.f32 0.0, %v605
  %v607 = vpop.f32.mrf.mxu0
  %v608 = vadd.f32 0.0, %v607
  %609 = vmatmul.bf16.gmra.mxu0 %v554
  %v610 = vpop.f32.mrf.mxu0
  %v611 = vadd.f32 0.0, %v610
  %v612 = vpop.f32.mrf.mxu0
  %v613 = vadd.f32 0.0, %v612
  %614 = vmatmul.bf16.gmra.mxu0 %v557
  %v615 = vpop.f32.mrf.mxu0
  %v616 = vadd.f32 0.0, %v615
  %v617 = vpop.f32.mrf.mxu0
  %v618 = vadd.f32 0.0, %v617
  %619 = vdwg.mxu0
  %v620 = vadd.f32 %v569, %v601
  %v621 = vadd.f32 %v571, %v603
  %v622 = vadd.f32 %v574, %v606
  %v623 = vadd.f32 %v576, %v608
  %v624 = vadd.f32 %v579, %v611
  %v625 = vadd.f32 %v581, %v613
  %v626 = vadd.f32 %v584, %v616
  %v627 = vadd.f32 %v586, %v618
  %v628 = vld [vmem:[%s1 + $0x68] sm:$0x1]
  %v629 = vperm.slane %v628, 0
  %v630 = vadd.f32 %v620, %v629
  %v631 = vadd.f32 %v621, %v629
  %v632 = vadd.f32 %v622, %v629
  %v633 = vadd.f32 %v623, %v629
  %v634 = vadd.f32 %v624, %v629
  %v635 = vadd.f32 %v625, %v629
  %v636 = vadd.f32 %v626, %v629
  %v637 = vadd.f32 %v627, %v629
  %v638 = vtanh.pop %v630
  %v639 = vtanh.pop %v631
  %v640 = vtanh.pop %v632
  %v641 = vtanh.pop %v633
  %v642 = vtanh.pop %v634
  %v643 = vtanh.pop %v635
  %v644 = vtanh.pop %v636
  %v645 = vtanh.pop %v637
  %v646 = vld [vmem:[%s1 + $0x70] sm:$0xff]
  %v647 = vld [vmem:[%s1 + $0x78] sm:$0xff]
  %v648 = vld [vmem:[%s1 + $0x80] sm:$0xff]
  %v649 = vld [vmem:[%s1 + $0x88] sm:$0xff]
  %v650 = vld [vmem:[%s1 + $0x90] sm:$0xff]
  %v651 = vpack.c.bf16 %v638, %v638
  %v652 = vpack.c.bf16 %v639, %v639
  %v653 = vpack.c.bf16 %v640, %v640
  %v654 = vpack.c.bf16 %v641, %v641
  %v655 = vpack.c.bf16 %v642, %v642
  %v656 = vpack.c.bf16 %v643, %v643
  %v657 = vpack.c.bf16 %v644, %v644
  %v658 = vpack.c.bf16 %v645, %v645
  %v659 = vunpack.c.l.bf16 %v651
  %v660 = vunpack.c.l.bf16 %v652
  %v661 = vunpack.c.l.bf16 %v653
  %v662 = vunpack.c.l.bf16 %v654
  %v663 = vunpack.c.l.bf16 %v655
  %v664 = vunpack.c.l.bf16 %v656
  %v665 = vunpack.c.l.bf16 %v657
  %v666 = vunpack.c.l.bf16 %v658
  %v667 = vsub.f32 %v638, %v659
  %v668 = vsub.f32 %v639, %v660
  %v669 = vsub.f32 %v640, %v661
  %v670 = vsub.f32 %v641, %v662
  %v671 = vsub.f32 %v642, %v663
  %v672 = vsub.f32 %v643, %v664
  %v673 = vsub.f32 %v644, %v665
  %v674 = vsub.f32 %v645, %v666
  %v675 = vpack.c.bf16 %v668, %v667
  %v676 = vpack.c.bf16 %v670, %v669
  %v677 = vpack.c.bf16 %v672, %v671
  %v678 = vpack.c.bf16 %v674, %v673
  %v679 = vpack.c.bf16 %v646, %v646
  %v680 = vpack.c.bf16 %v647, %v647
  %v681 = vpack.c.bf16 %v648, %v648
  %v682 = vpack.c.bf16 %v649, %v649
  %v683 = vpack.c.bf16 %v650, %v650
  %v684 = vunpack.c.l.bf16 %v679
  %v685 = vunpack.c.l.bf16 %v680
  %v686 = vunpack.c.l.bf16 %v681
  %v687 = vunpack.c.l.bf16 %v682
  %v688 = vunpack.c.l.bf16 %v683
  %v689 = vsub.f32 %v646, %v684
  %v690 = vsub.f32 %v647, %v685
  %v691 = vsub.f32 %v648, %v686
  %v692 = vsub.f32 %v649, %v687
  %v693 = vsub.f32 %v650, %v688
  %v694 = vpack.c.bf16 %v690, %v689
  %v695 = vpack.c.bf16 %v692, %v691
  %v696 = vpack.c.bf16 %v693, %v693
  %v702 = vunpack.c.l.b16 %v679
  %v703 = vunpack.c.l.b16 %v680
  %v704 = vunpack.c.l.b16 %v681
  %v705 = vunpack.c.l.b16 %v682
  %v706 = vunpack.c.l.b16 %v683
  %v707 = vpack.c.b16 %v703, %v702
  %v708 = vpack.c.b16 %v705, %v704
  %v709 = vpack.c.b16 %v706, %v706
  %v713 = vsel %vm252, %v675, 0
  %v716 = vsel %vm252, %v676, 0
  %v719 = vsel %vm252, %v677, 0
  %v722 = vsel %vm252, %v678, 0
  %v725 = vsel %vm265, %v709, 0
  %727 = vmatpush.bf16.msra.mxu0 0
  %728 = vmatpush.bf16.msra.mxu0 0
  %729 = vmatpush.bf16.msra.mxu0 0
  %730 = vmatpush.bf16.msra.mxu0 0
  %731 = vmatpush.bf16.msra.mxu0 0
  %732 = vmatpush.bf16.msra.mxu0 %v725
  %733 = vmatpush.bf16.msra.mxu0 %v708
  %734 = vmatpush.bf16.msra.mxu0 %v707
  %735 = vmatmul.bf16.gmra.mxu0 %v713
  %v736 = vpop.f32.mrf.mxu0
  %v737 = vadd.f32 0.0, %v736
  %v738 = vpop.f32.mrf.mxu0
  %v739 = vadd.f32 0.0, %v738
  %740 = vmatmul.bf16.gmra.mxu0 %v716
  %v741 = vpop.f32.mrf.mxu0
  %v742 = vadd.f32 0.0, %v741
  %v743 = vpop.f32.mrf.mxu0
  %v744 = vadd.f32 0.0, %v743
  %745 = vmatmul.bf16.gmra.mxu0 %v719
  %v746 = vpop.f32.mrf.mxu0
  %v747 = vadd.f32 0.0, %v746
  %v748 = vpop.f32.mrf.mxu0
  %v749 = vadd.f32 0.0, %v748
  %750 = vmatmul.bf16.gmra.mxu0 %v722
  %v751 = vpop.f32.mrf.mxu0
  %v752 = vadd.f32 0.0, %v751
  %v753 = vpop.f32.mrf.mxu0
  %v754 = vadd.f32 0.0, %v753
  %755 = vdwg.mxu0
  %v764 = vunpack.c.l.b16 %v651
  %v765 = vunpack.c.l.b16 %v652
  %v766 = vunpack.c.l.b16 %v653
  %v767 = vunpack.c.l.b16 %v654
  %v768 = vunpack.c.l.b16 %v655
  %v769 = vunpack.c.l.b16 %v656
  %v770 = vunpack.c.l.b16 %v657
  %v771 = vunpack.c.l.b16 %v658
  %v772 = vpack.c.b16 %v765, %v764
  %v773 = vpack.c.b16 %v767, %v766
  %v774 = vpack.c.b16 %v769, %v768
  %v775 = vpack.c.b16 %v771, %v770
  %v777 = vsel %vm252, %v772, 0
  %v780 = vsel %vm252, %v773, 0
  %v783 = vsel %vm252, %v774, 0
  %v786 = vsel %vm252, %v775, 0
  %788 = vmatpush.bf16.msra.mxu0 0
  %789 = vmatpush.bf16.msra.mxu0 0
  %790 = vmatpush.bf16.msra.mxu0 0
  %791 = vmatpush.bf16.msra.mxu0 0
  %792 = vmatpush.bf16.msra.mxu0 0
  %793 = vmatpush.bf16.msra.mxu0 %v725
  %794 = vmatpush.bf16.msra.mxu0 %v708
  %795 = vmatpush.bf16.msra.mxu0 %v707
  %796 = vmatmul.bf16.gmra.mxu0 %v777
  %v797 = vpop.f32.mrf.mxu0
  %v798 = vadd.f32 %v737, %v797
  %v799 = vpop.f32.mrf.mxu0
  %v800 = vadd.f32 %v739, %v799
  %801 = vmatmul.bf16.gmra.mxu0 %v780
  %v802 = vpop.f32.mrf.mxu0
  %v803 = vadd.f32 %v742, %v802
  %v804 = vpop.f32.mrf.mxu0
  %v805 = vadd.f32 %v744, %v804
  %806 = vmatmul.bf16.gmra.mxu0 %v783
  %v807 = vpop.f32.mrf.mxu0
  %v808 = vadd.f32 %v747, %v807
  %v809 = vpop.f32.mrf.mxu0
  %v810 = vadd.f32 %v749, %v809
  %811 = vmatmul.bf16.gmra.mxu0 %v786
  %v812 = vpop.f32.mrf.mxu0
  %v813 = vadd.f32 %v752, %v812
  %v814 = vpop.f32.mrf.mxu0
  %v815 = vadd.f32 %v754, %v814
  %816 = vdwg.mxu0
  %v818 = vsel %vm265, %v696, 0
  %820 = vmatpush.bf16.msra.mxu0 0
  %821 = vmatpush.bf16.msra.mxu0 0
  %822 = vmatpush.bf16.msra.mxu0 0
  %823 = vmatpush.bf16.msra.mxu0 0
  %824 = vmatpush.bf16.msra.mxu0 0
  %825 = vmatpush.bf16.msra.mxu0 %v818
  %826 = vmatpush.bf16.msra.mxu0 %v695
  %827 = vmatpush.bf16.msra.mxu0 %v694
  %828 = vmatmul.bf16.gmra.mxu0 %v777
  %v829 = vpop.f32.mrf.mxu0
  %v830 = vadd.f32 0.0, %v829
  %v831 = vpop.f32.mrf.mxu0
  %v832 = vadd.f32 0.0, %v831
  %833 = vmatmul.bf16.gmra.mxu0 %v780
  %v834 = vpop.f32.mrf.mxu0
  %v835 = vadd.f32 0.0, %v834
  %v836 = vpop.f32.mrf.mxu0
  %v837 = vadd.f32 0.0, %v836
  %838 = vmatmul.bf16.gmra.mxu0 %v783
  %v839 = vpop.f32.mrf.mxu0
  %v840 = vadd.f32 0.0, %v839
  %v841 = vpop.f32.mrf.mxu0
  %v842 = vadd.f32 0.0, %v841
  %843 = vmatmul.bf16.gmra.mxu0 %v786
  %v844 = vpop.f32.mrf.mxu0
  %v845 = vadd.f32 0.0, %v844
  %v846 = vpop.f32.mrf.mxu0
  %v847 = vadd.f32 0.0, %v846
  %848 = vdwg.mxu0
  %v849 = vadd.f32 %v798, %v830
  %v850 = vadd.f32 %v800, %v832
  %v851 = vadd.f32 %v803, %v835
  %v852 = vadd.f32 %v805, %v837
  %v853 = vadd.f32 %v808, %v840
  %v854 = vadd.f32 %v810, %v842
  %v855 = vadd.f32 %v813, %v845
  %v856 = vadd.f32 %v815, %v847
  %v857 = vld [vmem:[%s1 + $0x98] sm:$0x1]
  %v858 = vperm.slane %v857, 0
  %v859 = vadd.f32 %v849, %v858
  %v860 = vadd.f32 %v850, %v858
  %v861 = vadd.f32 %v851, %v858
  %v862 = vadd.f32 %v852, %v858
  %v863 = vadd.f32 %v853, %v858
  %v864 = vadd.f32 %v854, %v858
  %v865 = vadd.f32 %v855, %v858
  %v866 = vadd.f32 %v856, %v858
  %vm867 = vcmask 15360
  %868 = vst.msk [vmem:[%s2] sm:$0xff] %vm867, %v859
  %869 = vst.msk [vmem:[%s2 + $0x8] sm:$0xff] %vm867, %v860
  %870 = vst.msk [vmem:[%s2 + $0x10] sm:$0xff] %vm867, %v861
  %871 = vst.msk [vmem:[%s2 + $0x18] sm:$0xff] %vm867, %v862
  %872 = vst.msk [vmem:[%s2 + $0x20] sm:$0xff] %vm867, %v863
  %873 = vst.msk [vmem:[%s2 + $0x28] sm:$0xff] %vm867, %v864
  %874 = vst.msk [vmem:[%s2 + $0x30] sm:$0xff] %vm867, %v865
  %875 = vst.msk [vmem:[%s2 + $0x38] sm:$0xff] %vm867, %v866
  // Predicated region
  $region10: #{tpu_custom_call.1} parent=0 // pred_check
    _
  $region11: #{tpu_custom_call.1} parent=0 // pred_check_branch
    %877 = sbr.rel (0) target = $region13
  $region12: #{tpu_custom_call.1} parent=0 // pred_region
    _
  $region13: #{tpu_custom_call.1} parent=0 // pred_fallthru
    _
  // Predicated region
  $region14: #{tpu_custom_call.1} parent=0 // pred_check
    _
  $region15: #{tpu_custom_call.1} parent=0 // pred_check_branch
    %879 = sbr.rel (0) target = $region17
  $region16: #{tpu_custom_call.1} parent=0 // pred_region
    _
  $region17: #{tpu_custom_call.1} parent=0 // pred_fallthru
    _

</llo_original>
